<compile_context>
chip_gen: v5e
topology: v5e:2x2
jax: 0.10.0
libtpu: 0.0.40
codegen_flags: <defaults>
</compile_context>

<pallas_src>
import functools

import jax
import jax.numpy as jnp
from jax.experimental import pallas as pl
from jax.experimental.pallas import tpu as pltpu

LANES = 128
SUBLANES = 8
TARGET_BLOCK_BYTES = 4 * 1024 * 1024   # ~4 MiB per block, dtype-scaled row count
MIN_GRID_BLOCKS = 4                    # give v7x's 2 TCs >= 2 blocks each when possible
VMEM_LIMIT_BYTES = 40 * 1024 * 1024    # 2x in + 2x out 4 MiB buffers + scratch headroom


def _round_up(a: int, b: int) -> int:
    return -(-a // b) * b


def _relux_kernel(x_ref, o_ref, *, scale):
    # relu6(x * scale) / scale  (faithful to the PyTorch module's math)
    x = x_ref[...]
    y = jnp.minimum(jnp.maximum(x * scale, 0.0), 6.0) / scale
    o_ref[...] = y.astype(o_ref.dtype)


def _relux_slab(slab: jax.Array, scale: float) -> jax.Array:
    """Run the elementwise clamp over a lane-dense (rows, 128) slab."""
    rows = slab.shape[0]
    itemsize = jnp.dtype(slab.dtype).itemsize

    # Byte-constant tiling: keep every block at ~TARGET_BLOCK_BYTES regardless
    # of dtype (8192 rows f32, 16384 rows bf16, ...). Rows stay a multiple of 8.
    row_tile = max(SUBLANES,
                   (TARGET_BLOCK_BYTES // (LANES * itemsize)) // SUBLANES * SUBLANES)

    # Ensure multiple grid steps when the slab is non-trivial so the "parallel"
    # axis can be sharded across v7x's two TensorCores (no effect on v5e/v6e).
    n_splittable = rows // SUBLANES
    target_blocks = min(MIN_GRID_BLOCKS, max(1, n_splittable))
    if target_blocks > 1:
        tile_rows = min(row_tile, _round_up(pl.cdiv(rows, target_blocks), SUBLANES))
    else:
        tile_rows = rows  # tiny slab: single full-extent block (always legal)

    grid = (pl.cdiv(rows, tile_rows),)

    return pl.pallas_call(
        functools.partial(_relux_kernel, scale=scale),
        out_shape=jax.ShapeDtypeStruct((rows, LANES), slab.dtype),
        grid=grid,
        in_specs=[pl.BlockSpec((tile_rows, LANES), lambda i: (i, 0))],
        out_specs=pl.BlockSpec((tile_rows, LANES), lambda i: (i, 0)),
        compiler_params=pltpu.CompilerParams(
            dimension_semantics=("parallel",),
            vmem_limit_bytes=VMEM_LIMIT_BYTES,
        ),
    )(slab)


@functools.partial(jax.jit, static_argnames=("max_value",))
def relux(x: jax.Array, max_value: float = 1.0) -> jax.Array:
    """Elementwise ReLUX (= relu6(x*scale)/scale, i.e. clamp to [0, max_value])."""
    scale = 6.0 / float(max_value)
    orig_shape = x.shape
    n = x.size

    flat = jnp.reshape(x, (-1,))  # contiguous reshape -> bitcast under jit
    rows = n // LANES
    tail = n - rows * LANES

    if tail == 0:
        out = _relux_slab(jnp.reshape(flat, (rows, LANES)), scale)
        return jnp.reshape(out, orig_shape)

    # Unaligned element count: clamp the 128-aligned bulk in the kernel and the
    # (<128-element) tail with plain jnp, then stitch them back together. No
    # full-array zero-padding is performed.
    # TODO(synk): a fully copy-free unaligned path would need 1-D / manual-DMA
    # blocking of the flat buffer.
    pieces = []
    if rows > 0:
        bulk = jnp.reshape(flat[: rows * LANES], (rows, LANES))
        pieces.append(jnp.reshape(_relux_slab(bulk, scale), (-1,)))
    tail_in = flat[rows * LANES:]
    pieces.append(jnp.minimum(jnp.maximum(tail_in * scale, 0.0), 6.0) / scale)
    out = jnp.concatenate(pieces) if len(pieces) > 1 else pieces[0]
    return jnp.reshape(out, orig_shape)


def relux_ref(x, max_value=1.0):
    scale = 6.0 / float(max_value)
    return jnp.minimum(jnp.maximum(x * scale, 0.0), 6.0) / scale


if __name__ == "__main__":
    max_value = 1.0

    # NCHW input consistent with how ReLUX is used inside the Game-of-Life conv net.
    x = jax.random.normal(jax.random.PRNGKey(0), (2, 4, 16, 16), dtype=jnp.float32) * 2.0
    y = jax.block_until_ready(relux(x, max_value=max_value))
    y_ref = relux_ref(x, max_value=max_value)
    assert y.shape == x.shape and y.dtype == x.dtype
    assert jnp.allclose(y, y_ref, atol=1e-6, rtol=1e-6), "mismatch vs reference"

    # Non-128-divisible size with a 128-aligned bulk + tail (exercises concat path).
    x2 = jax.random.normal(jax.random.PRNGKey(1), (3, 50, 50), dtype=jnp.float32) * 2.0
    y2 = jax.block_until_ready(relux(x2, max_value=max_value))
    y2_ref = relux_ref(x2, max_value=max_value)
    assert y2.shape == x2.shape and y2.dtype == x2.dtype
    assert jnp.allclose(y2, y2_ref, atol=1e-6, rtol=1e-6), "mismatch vs reference (tail)"

    # Tiny non-128-divisible size (pure tail path).
    x3 = jax.random.normal(jax.random.PRNGKey(2), (3, 5, 7), dtype=jnp.float32) * 2.0
    y3 = jax.block_until_ready(relux(x3, max_value=max_value))
    assert jnp.allclose(y3, relux_ref(x3, max_value=max_value), atol=1e-6, rtol=1e-6)

    # bf16 input to exercise dtype-scaled (byte-constant) block sizing.
    x4 = (jax.random.normal(jax.random.PRNGKey(3), (2, 4, 16, 16), dtype=jnp.float32) * 2.0
          ).astype(jnp.bfloat16)
    y4 = jax.block_until_ready(relux(x4, max_value=max_value))
    assert y4.dtype == jnp.bfloat16
    assert jnp.allclose(y4.astype(jnp.float32),
                        relux_ref(x4, max_value=max_value).astype(jnp.float32),
                        atol=1e-2, rtol=1e-2), "mismatch vs reference (bf16)"

    print("KERNEL_OK")
</pallas_src>

<mosaic_0001>
module attributes {stable_mosaic.version = 11 : i64} {
  func.func @_relux_kernel(%arg0: i32, %arg1: memref<8x128xf32, #tpu.memory_space<vmem>>, %arg2: memref<8x128xf32, #tpu.memory_space<vmem>>) attributes {dimension_semantics = [#tpu.dimension_semantics<parallel>], iteration_bounds = array<i64: 2>, scalar_prefetch = 0 : i64, scratch_operands = 0 : i64, tpu.core_type = #tpu.core_type<tc>, window_params = [{transform_indices = @transform_0, window_bounds = array<i64: 8, 128>}, {transform_indices = @transform_1, window_bounds = array<i64: 8, 128>}]} {
    %c0 = arith.constant 0 : index
    %c0_0 = arith.constant 0 : index
    %0 = vector.load %arg1[%c0, %c0_0] : memref<8x128xf32, #tpu.memory_space<vmem>>, vector<8x128xf32>
    %cst = arith.constant 6.000000e+00 : f32
    %1 = vector.broadcast %cst : f32 to vector<8x128xf32>
    %2 = arith.mulf %0, %1 : vector<8x128xf32>
    %cst_1 = arith.constant 0.000000e+00 : f32
    %3 = vector.broadcast %cst_1 : f32 to vector<8x128xf32>
    %4 = arith.maximumf %2, %3 : vector<8x128xf32>
    %cst_2 = arith.constant 6.000000e+00 : f32
    %5 = vector.broadcast %cst_2 : f32 to vector<8x128xf32>
    %6 = arith.minimumf %4, %5 : vector<8x128xf32>
    %cst_3 = arith.constant 6.000000e+00 : f32
    %7 = vector.broadcast %cst_3 : f32 to vector<8x128xf32>
    %8 = arith.divf %6, %7 : vector<8x128xf32>
    %c0_4 = arith.constant 0 : index
    %c0_5 = arith.constant 0 : index
    %9 = vector.load %arg2[%c0_4, %c0_5] : memref<8x128xf32, #tpu.memory_space<vmem>>, vector<8x128xf32>
    tpu.vector_store %arg2[%c0_4, %c0_5], %8 {strides = array<i32>} : memref<8x128xf32, #tpu.memory_space<vmem>>, vector<8x128xf32>,
    return
  }
  func.func @transform_0(%arg0: i32) -> (i32, i32) {
    %c0_i32 = arith.constant 0 : i32
    %c0_i32_0 = arith.constant 0 : i32
    return %arg0, %c0_i32 : i32, i32
  }
  func.func @transform_1(%arg0: i32) -> (i32, i32) {
    %c0_i32 = arith.constant 0 : i32
    %c0_i32_0 = arith.constant 0 : i32
    return %arg0, %c0_i32 : i32, i32
  }
}

</mosaic_0001>

<llo_original>
// kernel: relux.1
$region0: #{relux.1}
  #allocation0 [shape = 'u32[]', space=smem, size = 0x4, offset = 0x4, fixed_abs, tag = 'smem constant byte address 0x4 - core index']
  #allocation1 [shape = 'u32[72,128]{1,0:T(1,128)}', space=vmem, size = 0x9000, scoped, tag = 'internal scratch']
  %s0 = inlined_call_operand.vmem [shape: f32[16,128], index: 0, kind: input, shape index: {}]
  %s1 = inlined_call_operand.vmem [shape: f32[16,128], index: 1, kind: output, shape index: {}]
  %s2 = sld [smem:[#allocation0]]
  $region37: #{relux.1} parent=0
    _
  %s4 = ssub.s32 1, %s2
  %s5 = scalar_select 0, %s4, %s2
  loop: start=0, step=1, limit=4
  $region2: #{relux.1} parent=0 // loop_pre_header
    _
  $region3: #{relux.1} parent=0 // loop_header
    %s7 = sphi 0, %s11
    %p8 = scmp.ge.s32.totalorder %s7, 4
    %s17 = sphi 0, %s19
    %s20 = sphi 0, %s17
    %s21 = sphi 0, %s20
    %s37 = sphi 0, %s21
    %s43 = sphi 0, %s45
    %s46 = sphi 0, %s43
    %s47 = sphi 0, %s46
    %s63 = sphi 0, %s47
  $region4: #{relux.1} parent=0 // loop_header_branch
    %10 = sbr.rel (%p8) target = $region8
  $region5: #{relux.1} parent=0 // loop_body
    %s12 = ssub.s32 %s7, 1
    %s13 = ssub.s32 %s7, 2
    %s14 = sadd.s32 %s7, 1
    %s15 = ssub.s32 %s7, %s14
    %p16 = scmp.eq.s32.totalorder %s15, 0
    %s18 = sadd.s32 %s17, 1
    %s19 = scalar_select %p16, %s17, %s18
    %p22 = pneg %p16
    %p23 = scmp.eq.s32.totalorder %s7, 1
    %p24 = por %p22, %p23
    %p25 = scmp.ne.s32.totalorder %s17, %s20
    %p26 = scmp.eq.s32.totalorder %s7, 0
    %p27 = por %p25, %p26
    %p28 = scmp.ne.s32.totalorder %s17, %s20
    %p29 = scmp.eq.s32.totalorder %s12, 1
    %p30 = por %p28, %p29
    %p31 = scmp.ne.s32.totalorder %s20, %s21
    %p32 = scmp.eq.s32.totalorder %s12, 0
    %p33 = por %p31, %p32
    %p34 = scmp.ne.s32.totalorder %s20, %s21
    %p35 = scmp.eq.s32.totalorder %s13, 1
    %p36 = por %p34, %p35
    %p38 = scmp.ne.s32.totalorder %s21, %s37
    %p39 = scmp.eq.s32.totalorder %s13, 0
    %p40 = por %p38, %p39
    %s41 = ssub.s32 %s7, %s14
    %p42 = scmp.eq.s32.totalorder %s41, 0
    %s44 = sadd.s32 %s43, 1
    %s45 = scalar_select %p42, %s43, %s44
    %p48 = pneg %p42
    %p49 = scmp.eq.s32.totalorder %s7, 1
    %p50 = por %p48, %p49
    %p51 = scmp.ne.s32.totalorder %s43, %s46
    %p52 = scmp.eq.s32.totalorder %s7, 0
    %p53 = por %p51, %p52
    %p54 = scmp.ne.s32.totalorder %s43, %s46
    %p55 = scmp.eq.s32.totalorder %s12, 1
    %p56 = por %p54, %p55
    %p57 = scmp.ne.s32.totalorder %s46, %s47
    %p58 = scmp.eq.s32.totalorder %s12, 0
    %p59 = por %p57, %p58
    %p60 = scmp.ne.s32.totalorder %s46, %s47
    %p61 = scmp.eq.s32.totalorder %s13, 1
    %p62 = por %p60, %p61
    %p64 = scmp.ne.s32.totalorder %s47, %s63
    %p65 = scmp.eq.s32.totalorder %s13, 0
    %p66 = por %p64, %p65
    %p67 = scmp.le.s32.totalorder 1, %s7
    %p68 = scmp.lt.s32.totalorder %s7, 3
    %p69 = pnand %p67, %p68
    %p70 = pneg %p69
    // Predicated region
    $region9: #{relux.1} parent=5 // pred_check
      _
    $region10: #{relux.1} parent=5 // pred_check_branch
      %72 = sbr.rel (%p69) target = $region12
    $region11: #{relux.1} parent=5 // pred_region
      %s73 = ssub.s32 %s7, 1
    $region12: #{relux.1} parent=5 // pred_fallthru
      _
    %p74 = scmp.lt.s32.totalorder %s7, 2
    // Predicated region
    $region13: #{relux.1} parent=5 // pred_check
      %p75 = pneg %p74
    $region14: #{relux.1} parent=5 // pred_check_branch
      %77 = sbr.rel (%p75) target = $region16
    $region15: #{relux.1} parent=5 // pred_region
      // Predicated region
      $region17: #{relux.1} parent=15 // pred_check
        %p78 = pneg %p27
      $region18: #{relux.1} parent=15 // pred_check_branch
        %80 = sbr.rel (%p78) target = $region20
      $region19: #{relux.1} parent=15 // pred_region
        %p81 = scmp.lt.s32.totalorder %s7, 1
        %s82 = scalar_select %p81, %s7, 1
        %s83 = smul.addr %s82, 8
        %s84 = scalar_lea.vmem %s0, %s83
      $region20: #{relux.1} parent=15 // pred_fallthru
        _
    $region16: #{relux.1} parent=5 // pred_fallthru
      _
    %p85 = scmp.le.s32.totalorder 1, %s7
    %p86 = scmp.lt.s32.totalorder %s7, 3
    %p87 = pnand %p85, %p86
    %p88 = pneg %p87
    // Predicated region
    $region21: #{relux.1} parent=5 // pred_check
      _
    $region22: #{relux.1} parent=5 // pred_check_branch
      %90 = sbr.rel (%p87) target = $region24
    $region23: #{relux.1} parent=5 // pred_region
      %s91 = ssub.s32 %s7, 1
      %p92 = scmp.lt.s32.totalorder %s12, 1
      %s93 = scalar_select %p92, %s12, 1
      %s94 = smul.addr %s93, 8
      %s95 = scalar_lea.vmem %s0, %s94
      %p96 = pneg %p33
      %p97 = pneg %p30
      %p98 = pneg %p59
      %p99 = pneg %p56
      %p100 = scmp.lt.s32.totalorder %s12, 1
      %s101 = scalar_select %p100, %s12, 1
      %s102 = smul.addr %s101, 8
      %s103 = scalar_lea.vmem %s1, %s102
      %p104 = scmp.lt.s32.totalorder %s12, 1
      %s105 = scalar_select %p104, %s12, 1
      %s106 = smul.addr %s105, 8
      %s107 = scalar_lea.vmem %s0, %s106
      %p108 = scmp.lt.s32.totalorder %s12, 1
      %s109 = scalar_select %p108, %s12, 1
      %s110 = smul.addr %s109, 8
      %s111 = scalar_lea.vmem %s1, %s110
      %v112 = vld [vmem:[%s107] sm:$0xff]
      %v113 = vmul.f32 %v112, 6.0
      %v114 = vmax.f32 %v113, 0.0
      %v115 = vmin.f32 %v114, 6.0
      %v116 = vrcp.pop 6.0
      %v117 = vmul.f32 6.0, %v116
      %v118 = vsub.f32 1.0, %v117
      %v119 = vmul.f32 %v116, %v118
      %v120 = vadd.f32 %v116, %v119
      %vm121 = vweird.f32 %v116
      %v122 = vsel %vm121, %v116, %v120
      %v123 = vmul.f32 %v115, %v122
      %124 = vst [vmem:[%s111] sm:$0xff] %v123
      %p125 = scmp.lt.s32.totalorder %s12, 1
      %s126 = scalar_select %p125, %s12, 1
      %s127 = smul.addr %s126, 8
      %s128 = scalar_lea.vmem %s1, %s127
      // Predicated region
      $region25: #{relux.1} parent=23 // pred_check
        %p129 = pneg %p56
      $region26: #{relux.1} parent=23 // pred_check_branch
        %131 = sbr.rel (%p129) target = $region28
      $region27: #{relux.1} parent=23 // pred_region
        _
      $region28: #{relux.1} parent=23 // pred_fallthru
        _
    $region24: #{relux.1} parent=5 // pred_fallthru
      _
    %p132 = scmp.le.s32.totalorder 2, %s7
    // Predicated region
    $region29: #{relux.1} parent=5 // pred_check
      %p133 = pneg %p132
    $region30: #{relux.1} parent=5 // pred_check_branch
      %135 = sbr.rel (%p133) target = $region32
    $region31: #{relux.1} parent=5 // pred_region
      %s136 = ssub.s32 %s7, 2
      // Predicated region
      $region33: #{relux.1} parent=31 // pred_check
        %p137 = pneg %p62
      $region34: #{relux.1} parent=31 // pred_check_branch
        %139 = sbr.rel (%p137) target = $region36
      $region35: #{relux.1} parent=31 // pred_region
        %p140 = scmp.lt.s32.totalorder %s13, 1
        %s141 = scalar_select %p140, %s13, 1
        %s142 = smul.addr %s141, 8
        %s143 = scalar_lea.vmem %s1, %s142
      $region36: #{relux.1} parent=31 // pred_fallthru
        _
    $region32: #{relux.1} parent=5 // pred_fallthru
      _
  $region6: #{relux.1} parent=0 // loop_footer
    %s11 = sadd.s32 1, %s7
  $region7: #{relux.1} parent=0 // loop_footer_branch
    %6 = sbr.rel target = $region3
  $region8: #{relux.1} parent=0 // loop_exit
    _

</llo_original>
